<compile_context>
chip_gen: v7x
topology: tpu7x:2x2x1
jax: 0.10.0
libtpu: 0.0.40
codegen_flags: <defaults>
</compile_context>

<pallas_src>
import jax
import jax.numpy as jnp
from jax.experimental import pallas as pl
from jax.experimental.pallas import tpu as pltpu

LANE = 128
MAX_TILE_B = 2048


def _round_up(x, m):
    return ((x + m - 1) // m) * m


def _pad_to(x, shape):
    return jnp.pad(x, [(0, s - d) for d, s in zip(x.shape, shape)])


def _generator_kernel(z_ref, w1_ref, b1_ref, w2_ref, b2_ref, w3_ref, b3_ref, o_ref):
    """Fused 3-layer MLP on one (tb, noise_dim) batch tile; weights resident in VMEM.

    Matmuls accumulate in f32 (preferred_element_type); activations are cast
    back to the weight dtype (f32 or bf16) between layers.
    """
    cdt = w1_ref.dtype
    z = z_ref[...]

    # Layer 1: (tb, noise_dim) @ (noise_dim, 128) + (1, 128), ReLU
    h1 = jnp.dot(z, w1_ref[...], preferred_element_type=jnp.float32) + b1_ref[...]
    h1 = jnp.maximum(h1, 0.0).astype(cdt)

    # Layer 2: (tb, 128) @ (128, 128) + (1, 128), ReLU  (hidden 64 zero-padded to 128)
    h2 = jnp.dot(h1, w2_ref[...], preferred_element_type=jnp.float32) + b2_ref[...]
    h2 = jnp.maximum(h2, 0.0).astype(cdt)

    # Layer 3: (tb, 128) @ (128, out_dim) + (1, out_dim)
    out = jnp.dot(h2, w3_ref[...], preferred_element_type=jnp.float32) + b3_ref[...]
    o_ref[...] = out.astype(o_ref.dtype)


def prepare_params(params, compute_dtype=jnp.float32):
    """One-time pad + cast of the generator weights for the Pallas kernel.

    Call once (outside the training / sampling loop). The returned tuple is
    what generator_forward consumes every call, so there are no per-call
    pad/astype XLA ops for data that never changes.
      * w1 first dim stays at noise_dim (matches the unpadded z read).
      * hidden dims are zero-padded to the 128-lane width (lane-dense matmuls).
      * w3's output dim stays unpadded so the kernel writes the real output.
      * biases stay f32 (added to the f32 accumulator).
    """
    w1, b1, w2, b2, w3, b3 = params
    noise_dim, h1_dim = w1.shape
    h2_dim = w2.shape[1]
    out_dim = w3.shape[1]
    h1p = _round_up(h1_dim, LANE)
    h2p = _round_up(h2_dim, LANE)

    w1p = _pad_to(w1, (noise_dim, h1p)).astype(compute_dtype)
    b1p = _pad_to(b1.reshape(1, -1), (1, h1p)).astype(jnp.float32)
    w2p = _pad_to(w2, (h1p, h2p)).astype(compute_dtype)
    b2p = _pad_to(b2.reshape(1, -1), (1, h2p)).astype(jnp.float32)
    w3p = _pad_to(w3, (h2p, out_dim)).astype(compute_dtype)
    b3p = b3.reshape(1, out_dim).astype(jnp.float32)
    return (w1p, b1p, w2p, b2p, w3p, b3p)


def generator_forward(z, prepared, tile_b=MAX_TILE_B):
    """Generator MLP forward over an unpadded (B, noise_dim) z array."""
    w1, b1, w2, b2, w3, b3 = prepared
    B, noise_dim = z.shape
    assert noise_dim == w1.shape[0], "z feature dim must match prepared w1"
    h1p = w1.shape[1]
    h2p = w2.shape[1]
    out_dim = w3.shape[1]

    compute_dtype = w1.dtype
    if z.dtype != compute_dtype:
        # Callers can generate z directly in compute_dtype to skip this cast.
        z = z.astype(compute_dtype)

    # Sublane alignment: 8 rows for f32, 16 for bf16 packing.
    sub = 16 if compute_dtype == jnp.bfloat16 else 8
    tb = min(tile_b, _round_up(B, sub))
    if B >= 1024:
        # >= 4 grid steps: both v7x TensorCores get >= 2 steps each (per-core
        # DMA/compute overlap); on single-TC v5e/v6e this just deepens the pipeline.
        tb = min(tb, max(256, _round_up(pl.cdiv(B, 4), sub)))
    tb = _round_up(tb, sub)

    grid = (pl.cdiv(B, tb),)
    return pl.pallas_call(
        _generator_kernel,
        out_shape=jax.ShapeDtypeStruct((B, out_dim), jnp.float32),
        grid=grid,
        in_specs=[
            pl.BlockSpec((tb, noise_dim), lambda i: (i, 0)),    # z tile (pipelined)
            pl.BlockSpec((noise_dim, h1p), lambda i: (0, 0)),   # w1 (resident)
            pl.BlockSpec((1, h1p), lambda i: (0, 0)),           # b1 (resident)
            pl.BlockSpec((h1p, h2p), lambda i: (0, 0)),         # w2 (resident)
            pl.BlockSpec((1, h2p), lambda i: (0, 0)),           # b2 (resident)
            pl.BlockSpec((h2p, out_dim), lambda i: (0, 0)),     # w3 (resident)
            pl.BlockSpec((1, out_dim), lambda i: (0, 0)),       # b3 (resident)
        ],
        out_specs=pl.BlockSpec((tb, out_dim), lambda i: (i, 0)),
        compiler_params=pltpu.CompilerParams(
            dimension_semantics=("parallel",),
        ),
    )(z, w1, b1, w2, b2, w3, b3)


def init_params(key, noise_dim=100, output_dim=2):
    """Deterministic init matching nn.Linear semantics; weights stored (in, out)."""
    k1, k2, k3, k4, k5, k6 = jax.random.split(key, 6)

    def linear_init(kw, kb, fan_in, fan_out):
        bound = 1.0 / jnp.sqrt(float(fan_in))
        w = jax.random.uniform(kw, (fan_in, fan_out), jnp.float32, -bound, bound)
        b = jax.random.uniform(kb, (1, fan_out), jnp.float32, -bound, bound)
        return w, b

    w1, b1 = linear_init(k1, k2, noise_dim, 128)
    w2, b2 = linear_init(k3, k4, 128, 64)
    w3, b3 = linear_init(k5, k6, 64, output_dim)
    return (w1, b1, w2, b2, w3, b3)


def reference_forward(z, params):
    w1, b1, w2, b2, w3, b3 = params
    h1 = jnp.maximum(z @ w1 + b1, 0.0)
    h2 = jnp.maximum(h1 @ w2 + b2, 0.0)
    return h2 @ w3 + b3


if __name__ == "__main__":
    key = jax.random.PRNGKey(0)
    k_params, k_z_small, k_z_big = jax.random.split(key, 3)

    noise_dim, output_dim = 100, 2
    params = init_params(k_params, noise_dim=noise_dim, output_dim=output_dim)

    # f32 path: small batch, single grid step (tight tolerance).
    prepared_f32 = prepare_params(params, jnp.float32)
    z_small = jax.random.normal(k_z_small, (8, noise_dim), dtype=jnp.float32)
    out_small = jax.block_until_ready(generator_forward(z_small, prepared_f32))
    ref_small = reference_forward(z_small, params)
    assert out_small.shape == (8, output_dim)
    assert jnp.allclose(out_small, ref_small, atol=1e-4, rtol=1e-4)

    # bf16 path (v6e/v7x perf mode): large batch, multi-step pipelined grid.
    prepared_bf16 = prepare_params(params, jnp.bfloat16)
    z_big = jax.random.normal(k_z_big, (2048, noise_dim), dtype=jnp.float32)
    out_big = jax.block_until_ready(generator_forward(z_big, prepared_bf16))
    ref_big = reference_forward(z_big, params)
    assert out_big.shape == (2048, output_dim)
    assert jnp.allclose(out_big, ref_big, atol=5e-2, rtol=5e-2)

    print("KERNEL_OK")
</pallas_src>

<mosaic_0001>
module attributes {stable_mosaic.version = 11 : i64} {
  func.func @_generator_kernel(%arg0: i32, %arg1: memref<8x100xf32, #tpu.memory_space<vmem>>, %arg2: memref<100x128xf32, #tpu.memory_space<vmem>>, %arg3: memref<1x128xf32, #tpu.memory_space<vmem>>, %arg4: memref<128x128xf32, #tpu.memory_space<vmem>>, %arg5: memref<1x128xf32, #tpu.memory_space<vmem>>, %arg6: memref<128x2xf32, #tpu.memory_space<vmem>>, %arg7: memref<1x2xf32, #tpu.memory_space<vmem>>, %arg8: memref<8x2xf32, #tpu.memory_space<vmem>>) attributes {dimension_semantics = [#tpu.dimension_semantics<parallel>], iteration_bounds = array<i64: 1>, scalar_prefetch = 0 : i64, scratch_operands = 0 : i64, tpu.core_type = #tpu.core_type<tc>, window_params = [{transform_indices = @transform_0, window_bounds = array<i64: 8, 100>}, {pipeline_mode = #tpu.pipeline_mode<synchronous>, transform_indices = @transform_1, window_bounds = array<i64: 100, 128>}, {pipeline_mode = #tpu.pipeline_mode<synchronous>, transform_indices = @transform_2, window_bounds = array<i64: 1, 128>}, {pipeline_mode = #tpu.pipeline_mode<synchronous>, transform_indices = @transform_3, window_bounds = array<i64: 128, 128>}, {pipeline_mode = #tpu.pipeline_mode<synchronous>, transform_indices = @transform_4, window_bounds = array<i64: 1, 128>}, {pipeline_mode = #tpu.pipeline_mode<synchronous>, transform_indices = @transform_5, window_bounds = array<i64: 128, 2>}, {pipeline_mode = #tpu.pipeline_mode<synchronous>, transform_indices = @transform_6, window_bounds = array<i64: 1, 2>}, {transform_indices = @transform_7, window_bounds = array<i64: 8, 2>}]} {
    %c0 = arith.constant 0 : index
    %c0_0 = arith.constant 0 : index
    %0 = vector.load %arg1[%c0, %c0_0] : memref<8x100xf32, #tpu.memory_space<vmem>>, vector<8x100xf32>
    %c0_1 = arith.constant 0 : index
    %c0_2 = arith.constant 0 : index
    %1 = vector.load %arg2[%c0_1, %c0_2] : memref<100x128xf32, #tpu.memory_space<vmem>>, vector<100x128xf32>
    %cst = arith.constant dense<0.000000e+00> : vector<8x128xf32>
    %2 = tpu.matmul %0, %1, %cst {dimension_numbers = #tpu.dot_dimension_numbers<[1], [0], [0], [1], [0, 0, 1, 1], [], []>} : vector<8x100xf32>, vector<100x128xf32>, vector<8x128xf32> -> vector<8x128xf32>
    %c0_3 = arith.constant 0 : index
    %c0_4 = arith.constant 0 : index
    %3 = vector.load %arg3[%c0_3, %c0_4] : memref<1x128xf32, #tpu.memory_space<vmem>>, vector<1x128xf32>
    %4 = vector.broadcast %3 : vector<1x128xf32> to vector<8x128xf32>
    %5 = arith.addf %2, %4 : vector<8x128xf32>
    %cst_5 = arith.constant 0.000000e+00 : f32
    %6 = vector.broadcast %cst_5 : f32 to vector<8x128xf32>
    %7 = arith.maximumf %5, %6 : vector<8x128xf32>
    %c0_6 = arith.constant 0 : index
    %c0_7 = arith.constant 0 : index
    %8 = vector.load %arg4[%c0_6, %c0_7] : memref<128x128xf32, #tpu.memory_space<vmem>>, vector<128x128xf32>
    %cst_8 = arith.constant dense<0.000000e+00> : vector<8x128xf32>
    %9 = tpu.matmul %7, %8, %cst_8 {dimension_numbers = #tpu.dot_dimension_numbers<[1], [0], [0], [1], [0, 0, 1, 1], [], []>} : vector<8x128xf32>, vector<128x128xf32>, vector<8x128xf32> -> vector<8x128xf32>
    %c0_9 = arith.constant 0 : index
    %c0_10 = arith.constant 0 : index
    %10 = vector.load %arg5[%c0_9, %c0_10] : memref<1x128xf32, #tpu.memory_space<vmem>>, vector<1x128xf32>
    %11 = vector.broadcast %10 : vector<1x128xf32> to vector<8x128xf32>
    %12 = arith.addf %9, %11 : vector<8x128xf32>
    %cst_11 = arith.constant 0.000000e+00 : f32
    %13 = vector.broadcast %cst_11 : f32 to vector<8x128xf32>
    %14 = arith.maximumf %12, %13 : vector<8x128xf32>
    %c0_12 = arith.constant 0 : index
    %c0_13 = arith.constant 0 : index
    %15 = vector.load %arg6[%c0_12, %c0_13] : memref<128x2xf32, #tpu.memory_space<vmem>>, vector<128x2xf32>
    %cst_14 = arith.constant dense<0.000000e+00> : vector<8x2xf32>
    %16 = tpu.matmul %14, %15, %cst_14 {dimension_numbers = #tpu.dot_dimension_numbers<[1], [0], [0], [1], [0, 0, 1, 1], [], []>} : vector<8x128xf32>, vector<128x2xf32>, vector<8x2xf32> -> vector<8x2xf32>
    %c0_15 = arith.constant 0 : index
    %c0_16 = arith.constant 0 : index
    %17 = vector.load %arg7[%c0_15, %c0_16] : memref<1x2xf32, #tpu.memory_space<vmem>>, vector<1x2xf32>
    %18 = vector.broadcast %17 : vector<1x2xf32> to vector<8x2xf32>
    %19 = arith.addf %16, %18 : vector<8x2xf32>
    %c0_17 = arith.constant 0 : index
    %c0_18 = arith.constant 0 : index
    %20 = vector.load %arg8[%c0_17, %c0_18] : memref<8x2xf32, #tpu.memory_space<vmem>>, vector<8x2xf32>
    tpu.vector_store %arg8[%c0_17, %c0_18], %19 {strides = array<i32>} : memref<8x2xf32, #tpu.memory_space<vmem>>, vector<8x2xf32>,
    return
  }
  func.func @transform_0(%arg0: i32) -> (i32, i32) {
    %c0_i32 = arith.constant 0 : i32
    %c0_i32_0 = arith.constant 0 : i32
    return %arg0, %c0_i32 : i32, i32
  }
  func.func @transform_1(%arg0: i32) -> (i32, i32) {
    %c0_i32 = arith.constant 0 : i32
    %c0_i32_0 = arith.constant 0 : i32
    %c0_i32_1 = arith.constant 0 : i32
    return %c0_i32, %c0_i32_0 : i32, i32
  }
  func.func @transform_2(%arg0: i32) -> (i32, i32) {
    %c0_i32 = arith.constant 0 : i32
    %c0_i32_0 = arith.constant 0 : i32
    %c0_i32_1 = arith.constant 0 : i32
    return %c0_i32, %c0_i32_0 : i32, i32
  }
  func.func @transform_3(%arg0: i32) -> (i32, i32) {
    %c0_i32 = arith.constant 0 : i32
    %c0_i32_0 = arith.constant 0 : i32
    %c0_i32_1 = arith.constant 0 : i32
    return %c0_i32, %c0_i32_0 : i32, i32
  }
  func.func @transform_4(%arg0: i32) -> (i32, i32) {
    %c0_i32 = arith.constant 0 : i32
    %c0_i32_0 = arith.constant 0 : i32
    %c0_i32_1 = arith.constant 0 : i32
    return %c0_i32, %c0_i32_0 : i32, i32
  }
  func.func @transform_5(%arg0: i32) -> (i32, i32) {
    %c0_i32 = arith.constant 0 : i32
    %c0_i32_0 = arith.constant 0 : i32
    %c0_i32_1 = arith.constant 0 : i32
    return %c0_i32, %c0_i32_0 : i32, i32
  }
  func.func @transform_6(%arg0: i32) -> (i32, i32) {
    %c0_i32 = arith.constant 0 : i32
    %c0_i32_0 = arith.constant 0 : i32
    %c0_i32_1 = arith.constant 0 : i32
    return %c0_i32, %c0_i32_0 : i32, i32
  }
  func.func @transform_7(%arg0: i32) -> (i32, i32) {
    %c0_i32 = arith.constant 0 : i32
    %c0_i32_0 = arith.constant 0 : i32
    return %arg0, %c0_i32 : i32, i32
  }
}

</mosaic_0001>

<llo_original>
// kernel: tpu_custom_call.1
$region0: #{tpu_custom_call.1}
  #allocation0 [shape = 'u32[]', space=smem, size = 0x4, offset = 0x4, fixed_abs, tag = 'smem constant byte address 0x4 - core index']
  #allocation1 [shape = 'u32[144,128]{1,0:T(1,128)}', space=vmem, size = 0x12000, scoped, tag = 'internal scratch']
  %s0 = inlined_call_operand.vmem [shape: f32[8,100], index: 0, kind: input, shape index: {}]
  %s1 = inlined_call_operand.hbm [shape: f32[100,128], index: 1, kind: input, shape index: {}]
  %s2 = inlined_call_operand.vmem [shape: f32[1,128], index: 2, kind: input, shape index: {}]
  %s3 = inlined_call_operand.vmem [shape: f32[128,128], index: 3, kind: input, shape index: {}]
  %s4 = inlined_call_operand.vmem [shape: f32[1,128], index: 4, kind: input, shape index: {}]
  %s5 = inlined_call_operand.vmem [shape: f32[128,2], index: 5, kind: input, shape index: {}]
  %s6 = inlined_call_operand.vmem [shape: f32[1,2], index: 6, kind: input, shape index: {}]
  %s7 = inlined_call_operand.vmem [shape: f32[8,2], index: 7, kind: output, shape index: {}]
  %s8 = sld [smem:[#allocation0]]
  $region42: #{tpu_custom_call.1} parent=0
    _
  %s10 = ssub.s32 1, %s8
  %s11 = scalar_select 0, %s10, %s8
  $region1: #{tpu_custom_call.1} parent=0
    #allocation2 [shape = 'u8[53248]{0}', space=vmem, size = 0xd000, scoped, tag = 'input window, operand 1, single buffered']
    #allocation3 [shape = 's32[1]{0}', space=sflag, size = 0x4, scoped, tag = 'scoped memory for tpu_custom_call.1']
    %12 = vsyncpa [#allocation3], 0
    // Predicated region
    $region2: #{tpu_custom_call.1} parent=1 // pred_check
      _
    $region3: #{tpu_custom_call.1} parent=1 // pred_check_branch
      %14 = sbr.rel (0) target = $region5
    $region4: #{tpu_custom_call.1} parent=1 // pred_region
      _
    $region5: #{tpu_custom_call.1} parent=1 // pred_fallthru
      _
    // Predicated region
    $region6: #{tpu_custom_call.1} parent=1 // pred_check
      _
    $region7: #{tpu_custom_call.1} parent=1 // pred_check_branch
      %16 = sbr.rel (0) target = $region9
    $region8: #{tpu_custom_call.1} parent=1 // pred_region
      %s18 = ssub.s32 1664, 1664
      %19 = vsyncadd [#allocation3], %s18
      %s20 = sshll.u32 [#allocation2], 4
      %s21 = int_to_ptr.vmem [resolvable:$true] %s20
      %26 = dma.hbm_to_vmem [thread:$0]  %s1, 1664, %s21, [#allocation3], 128, 128, 8
    $region9: #{tpu_custom_call.1} parent=1 // pred_fallthru
      _
    // Predicated region
    $region10: #{tpu_custom_call.1} parent=1 // pred_check
      _
    $region11: #{tpu_custom_call.1} parent=1 // pred_check_branch
      %28 = sbr.rel (0) target = $region13
    $region12: #{tpu_custom_call.1} parent=1 // pred_region
      _
    $region13: #{tpu_custom_call.1} parent=1 // pred_fallthru
      _
    // Predicated region
    $region14: #{tpu_custom_call.1} parent=1 // pred_check
      _
    $region15: #{tpu_custom_call.1} parent=1 // pred_check_branch
      %30 = sbr.rel (0) target = $region17
    $region16: #{tpu_custom_call.1} parent=1 // pred_region
      _
    $region17: #{tpu_custom_call.1} parent=1 // pred_fallthru
      _
    // Predicated region
    $region18: #{tpu_custom_call.1} parent=1 // pred_check
      _
    $region19: #{tpu_custom_call.1} parent=1 // pred_check_branch
      %32 = sbr.rel (0) target = $region21
    $region20: #{tpu_custom_call.1} parent=1 // pred_region
      _
    $region21: #{tpu_custom_call.1} parent=1 // pred_fallthru
      _
    // Predicated region
    $region22: #{tpu_custom_call.1} parent=1 // pred_check
      _
    $region23: #{tpu_custom_call.1} parent=1 // pred_check_branch
      %34 = sbr.rel (0) target = $region25
    $region24: #{tpu_custom_call.1} parent=1 // pred_region
      _
    $region25: #{tpu_custom_call.1} parent=1 // pred_fallthru
      _
    // Predicated region
    $region26: #{tpu_custom_call.1} parent=1 // pred_check
      _
    $region27: #{tpu_custom_call.1} parent=1 // pred_check_branch
      %36 = sbr.rel (0) target = $region29
    $region28: #{tpu_custom_call.1} parent=1 // pred_region
      _
    $region29: #{tpu_custom_call.1} parent=1 // pred_fallthru
      _
    // Predicated region
    $region30: #{tpu_custom_call.1} parent=1 // pred_check
      _
    $region31: #{tpu_custom_call.1} parent=1 // pred_check_branch
      %38 = sbr.rel (0) target = $region33
    $region32: #{tpu_custom_call.1} parent=1 // pred_region
      %39 = dma.done [#allocation3], 1664
    $region33: #{tpu_custom_call.1} parent=1 // pred_fallthru
      _
    %v40 = vld [vmem:[%s0] sm:$0xff]
    %v41 = vld [vmem:[#allocation2] sm:$0xff]
    %v42 = vld [vmem:[#allocation2 + $0x8] sm:$0xff]
    %v43 = vld [vmem:[#allocation2 + $0x10] sm:$0xff]
    %v44 = vld [vmem:[#allocation2 + $0x18] sm:$0xff]
    %v45 = vld [vmem:[#allocation2 + $0x20] sm:$0xff]
    %v46 = vld [vmem:[#allocation2 + $0x28] sm:$0xff]
    %v47 = vld [vmem:[#allocation2 + $0x30] sm:$0xff]
    %v48 = vld [vmem:[#allocation2 + $0x38] sm:$0xff]
    %v49 = vld [vmem:[#allocation2 + $0x40] sm:$0xff]
    %v50 = vld [vmem:[#allocation2 + $0x48] sm:$0xff]
    %v51 = vld [vmem:[#allocation2 + $0x50] sm:$0xff]
    %v52 = vld [vmem:[#allocation2 + $0x58] sm:$0xff]
    %v53 = vld [vmem:[#allocation2 + $0x60] sm:$0xf]
    %v54 = vld [vmem:[%s2] sm:$0x1]
    %v56 = vlaneseq
    %v57 = vshrl.u32 %v56, 7
    %v58 = vsub.s32 0, %v57
    %v59 = vrot.slane %v54, %v58
    %vm61 = vcmask 818176
    %v63 = vsel %vm61, %v40, 0
    %vm65 = vcmask 1043456
    %v67 = vsel %vm65, %v53, 0
    %69 = vmatprep.subr.mxu0 0.0
    %70 = vmatpush1.msra.mxu0 %v41
    %71 = vmatprep.subr.mxu0 0.0
    %72 = vmatpush1.msra.mxu0 %v42
    %73 = vmatprep.subr.mxu0 0.0
    %74 = vmatpush1.msra.mxu0 %v43
    %75 = vmatprep.subr.mxu0 0.0
    %76 = vmatpush1.msra.mxu0 %v44
    %77 = vmatprep.subr.mxu0 0.0
    %78 = vmatpush1.msra.mxu0 %v45
    %79 = vmatprep.subr.mxu0 0.0
    %80 = vmatpush1.msra.mxu0 %v46
    %81 = vmatprep.subr.mxu0 0.0
    %82 = vmatpush1.msra.mxu0 %v47
    %83 = vmatprep.subr.mxu0 0.0
    %84 = vmatpush1.msra.mxu0 %v48
    %85 = vmatprep.subr.mxu0 0.0
    %86 = vmatpush1.msra.mxu0 %v49
    %87 = vmatprep.subr.mxu0 0.0
    %88 = vmatpush1.msra.mxu0 %v50
    %89 = vmatprep.subr.mxu0 0.0
    %90 = vmatpush1.msra.mxu0 %v51
    %91 = vmatprep.subr.mxu0 0.0
    %92 = vmatpush1.msra.mxu0 %v52
    %93 = vmatprep.subr.mxu0 0.0
    %94 = vmatpush1.msra.mxu0 %v67
    %95 = vmatprep.subr.mxu0 0.0
    %96 = vmatpush1.msra.mxu0 0.0
    %97 = vmatprep.subr.mxu0 0.0
    %98 = vmatpush1.msra.mxu0 0.0
    %99 = vmatprep.subr.mxu0 0.0
    %100 = vmatpush1.msra.mxu0 0.0
    %101 = vmatprep.subr.mxu0 0.0
    %102 = vmatpush1.msra.mxu0 0.0
    %103 = vmatprep.subr.mxu0 0.0
    %104 = vmatpush1.msra.mxu0 0.0
    %105 = vmatprep.subr.mxu0 0.0
    %106 = vmatpush1.msra.mxu0 0.0
    %107 = vmatprep.subr.mxu0 0.0
    %108 = vmatpush1.msra.mxu0 0.0
    %109 = vmatprep.subr.mxu0 0.0
    %110 = vmatpush1.msra.mxu0 0.0
    %111 = vmatprep.subr.mxu0 0.0
    %112 = vmatpush1.msra.mxu0 0.0
    %113 = vmatprep.subr.mxu0 0.0
    %114 = vmatpush1.msra.mxu0 0.0
    %115 = vmatprep.subr.mxu0 0.0
    %116 = vmatpush1.msra.mxu0 0.0
    %117 = vmatprep.subr.mxu0 0.0
    %118 = vmatpush1.msra.mxu0 0.0
    %119 = vmatprep.subr.mxu0 0.0
    %120 = vmatpush1.msra.mxu0 0.0
    %121 = vmatprep.subr.mxu0 0.0
    %122 = vmatpush1.msra.mxu0 0.0
    %123 = vmatprep.subr.mxu0 0.0
    %124 = vmatpush1.msra.mxu0 0.0
    %125 = vmatprep.subr.mxu0 0.0
    %126 = vmatpush1.msra.mxu0 0.0
    %127 = vmatprep.subr.mxu0 0.0
    %128 = vmatpush1.msra.mxu0 0.0
    %129 = vmatprep.subr.mxu0 0.0
    %130 = vmatpush1.msra.mxu0 0.0
    %131 = vmatprep.subr.mxu0 0.0
    %132 = vmatpush1.msra.mxu0 0.0
    %133 = vmatprep.mubr.f32.mxu0 0.0
    %134 = vmatmul.mubr.f32.gmra.mrb[0].mxu0 %v63
    %v135 = vpop.f32.mrb[0].mxu0
    %v136 = vadd.f32 %v59, %v135
    %v137 = vpop.f32.mrb[0].mxu0
    %138 = vdwg.mxu0
    %v139 = vmax.f32 %v136, 0.0
    %v140 = vld [vmem:[%s3] sm:$0xff]
    %v141 = vld [vmem:[%s3 + $0x8] sm:$0xff]
    %v142 = vld [vmem:[%s3 + $0x10] sm:$0xff]
    %v143 = vld [vmem:[%s3 + $0x18] sm:$0xff]
    %v144 = vld [vmem:[%s3 + $0x20] sm:$0xff]
    %v145 = vld [vmem:[%s3 + $0x28] sm:$0xff]
    %v146 = vld [vmem:[%s3 + $0x30] sm:$0xff]
    %v147 = vld [vmem:[%s3 + $0x38] sm:$0xff]
    %v148 = vld [vmem:[%s3 + $0x40] sm:$0xff]
    %v149 = vld [vmem:[%s3 + $0x48] sm:$0xff]
    %v150 = vld [vmem:[%s3 + $0x50] sm:$0xff]
    %v151 = vld [vmem:[%s3 + $0x58] sm:$0xff]
    %v152 = vld [vmem:[%s3 + $0x60] sm:$0xff]
    %v153 = vld [vmem:[%s3 + $0x68] sm:$0xff]
    %v154 = vld [vmem:[%s3 + $0x70] sm:$0xff]
    %v155 = vld [vmem:[%s3 + $0x78] sm:$0xff]
    %v156 = vld [vmem:[%s4] sm:$0x1]
    %v158 = vlaneseq
    %v159 = vshrl.u32 %v158, 7
    %v160 = vsub.s32 0, %v159
    %v161 = vrot.slane %v156, %v160
    %163 = vmatprep.subr.mxu0 0.0
    %164 = vmatpush1.msra.mxu0 %v140
    %165 = vmatprep.subr.mxu0 0.0
    %166 = vmatpush1.msra.mxu0 %v141
    %167 = vmatprep.subr.mxu0 0.0
    %168 = vmatpush1.msra.mxu0 %v142
    %169 = vmatprep.subr.mxu0 0.0
    %170 = vmatpush1.msra.mxu0 %v143
    %171 = vmatprep.subr.mxu0 0.0
    %172 = vmatpush1.msra.mxu0 %v144
    %173 = vmatprep.subr.mxu0 0.0
    %174 = vmatpush1.msra.mxu0 %v145
    %175 = vmatprep.subr.mxu0 0.0
    %176 = vmatpush1.msra.mxu0 %v146
    %177 = vmatprep.subr.mxu0 0.0
    %178 = vmatpush1.msra.mxu0 %v147
    %179 = vmatprep.subr.mxu0 0.0
    %180 = vmatpush1.msra.mxu0 %v148
    %181 = vmatprep.subr.mxu0 0.0
    %182 = vmatpush1.msra.mxu0 %v149
    %183 = vmatprep.subr.mxu0 0.0
    %184 = vmatpush1.msra.mxu0 %v150
    %185 = vmatprep.subr.mxu0 0.0
    %186 = vmatpush1.msra.mxu0 %v151
    %187 = vmatprep.subr.mxu0 0.0
    %188 = vmatpush1.msra.mxu0 %v152
    %189 = vmatprep.subr.mxu0 0.0
    %190 = vmatpush1.msra.mxu0 %v153
    %191 = vmatprep.subr.mxu0 0.0
    %192 = vmatpush1.msra.mxu0 %v154
    %193 = vmatprep.subr.mxu0 0.0
    %194 = vmatpush1.msra.mxu0 %v155
    %195 = vmatprep.subr.mxu0 0.0
    %196 = vmatpush1.msra.mxu0 0.0
    %197 = vmatprep.subr.mxu0 0.0
    %198 = vmatpush1.msra.mxu0 0.0
    %199 = vmatprep.subr.mxu0 0.0
    %200 = vmatpush1.msra.mxu0 0.0
    %201 = vmatprep.subr.mxu0 0.0
    %202 = vmatpush1.msra.mxu0 0.0
    %203 = vmatprep.subr.mxu0 0.0
    %204 = vmatpush1.msra.mxu0 0.0
    %205 = vmatprep.subr.mxu0 0.0
    %206 = vmatpush1.msra.mxu0 0.0
    %207 = vmatprep.subr.mxu0 0.0
    %208 = vmatpush1.msra.mxu0 0.0
    %209 = vmatprep.subr.mxu0 0.0
    %210 = vmatpush1.msra.mxu0 0.0
    %211 = vmatprep.subr.mxu0 0.0
    %212 = vmatpush1.msra.mxu0 0.0
    %213 = vmatprep.subr.mxu0 0.0
    %214 = vmatpush1.msra.mxu0 0.0
    %215 = vmatprep.subr.mxu0 0.0
    %216 = vmatpush1.msra.mxu0 0.0
    %217 = vmatprep.subr.mxu0 0.0
    %218 = vmatpush1.msra.mxu0 0.0
    %219 = vmatprep.subr.mxu0 0.0
    %220 = vmatpush1.msra.mxu0 0.0
    %221 = vmatprep.subr.mxu0 0.0
    %222 = vmatpush1.msra.mxu0 0.0
    %223 = vmatprep.subr.mxu0 0.0
    %224 = vmatpush1.msra.mxu0 0.0
    %225 = vmatprep.subr.mxu0 0.0
    %226 = vmatpush1.msra.mxu0 0.0
    %227 = vmatprep.mubr.f32.mxu0 0.0
    %228 = vmatmul.mubr.f32.gmra.mrb[0].mxu0 %v139
    %v229 = vpop.f32.mrb[0].mxu0
    %v230 = vadd.f32 %v161, %v229
    %v231 = vpop.f32.mrb[0].mxu0
    %232 = vdwg.mxu0
    %v233 = vmax.f32 %v230, 0.0
    %v234 = vld [vmem:[%s5] sm:$0xff]
    %v235 = vld [vmem:[%s5 + $0x8] sm:$0xff]
    %v236 = vld [vmem:[%s5 + $0x10] sm:$0xff]
    %v237 = vld [vmem:[%s5 + $0x18] sm:$0xff]
    %v238 = vld [vmem:[%s5 + $0x20] sm:$0xff]
    %v239 = vld [vmem:[%s5 + $0x28] sm:$0xff]
    %v240 = vld [vmem:[%s5 + $0x30] sm:$0xff]
    %v241 = vld [vmem:[%s5 + $0x38] sm:$0xff]
    %v242 = vld [vmem:[%s5 + $0x40] sm:$0xff]
    %v243 = vld [vmem:[%s5 + $0x48] sm:$0xff]
    %v244 = vld [vmem:[%s5 + $0x50] sm:$0xff]
    %v245 = vld [vmem:[%s5 + $0x58] sm:$0xff]
    %v246 = vld [vmem:[%s5 + $0x60] sm:$0xff]
    %v247 = vld [vmem:[%s5 + $0x68] sm:$0xff]
    %v248 = vld [vmem:[%s5 + $0x70] sm:$0xff]
    %v249 = vld [vmem:[%s5 + $0x78] sm:$0xff]
    %v250 = vld [vmem:[%s6] sm:$0x1]
    %v252 = vlaneseq
    %v253 = vshrl.u32 %v252, 7
    %v254 = vsub.s32 0, %v253
    %v255 = vrot.slane %v250, %v254
    %257 = vmatprep.subr.mxu0 0.0
    %258 = vmatpush1.msra.mxu0 %v234
    %259 = vmatprep.subr.mxu0 0.0
    %260 = vmatpush1.msra.mxu0 %v235
    %261 = vmatprep.subr.mxu0 0.0
    %262 = vmatpush1.msra.mxu0 %v236
    %263 = vmatprep.subr.mxu0 0.0
    %264 = vmatpush1.msra.mxu0 %v237
    %265 = vmatprep.subr.mxu0 0.0
    %266 = vmatpush1.msra.mxu0 %v238
    %267 = vmatprep.subr.mxu0 0.0
    %268 = vmatpush1.msra.mxu0 %v239
    %269 = vmatprep.subr.mxu0 0.0
    %270 = vmatpush1.msra.mxu0 %v240
    %271 = vmatprep.subr.mxu0 0.0
    %272 = vmatpush1.msra.mxu0 %v241
    %273 = vmatprep.subr.mxu0 0.0
    %274 = vmatpush1.msra.mxu0 %v242
    %275 = vmatprep.subr.mxu0 0.0
    %276 = vmatpush1.msra.mxu0 %v243
    %277 = vmatprep.subr.mxu0 0.0
    %278 = vmatpush1.msra.mxu0 %v244
    %279 = vmatprep.subr.mxu0 0.0
    %280 = vmatpush1.msra.mxu0 %v245
    %281 = vmatprep.subr.mxu0 0.0
    %282 = vmatpush1.msra.mxu0 %v246
    %283 = vmatprep.subr.mxu0 0.0
    %284 = vmatpush1.msra.mxu0 %v247
    %285 = vmatprep.subr.mxu0 0.0
    %286 = vmatpush1.msra.mxu0 %v248
    %287 = vmatprep.subr.mxu0 0.0
    %288 = vmatpush1.msra.mxu0 %v249
    %289 = vmatprep.subr.mxu0 0.0
    %290 = vmatpush1.msra.mxu0 0.0
    %291 = vmatprep.subr.mxu0 0.0
    %292 = vmatpush1.msra.mxu0 0.0
    %293 = vmatprep.subr.mxu0 0.0
    %294 = vmatpush1.msra.mxu0 0.0
    %295 = vmatprep.subr.mxu0 0.0
    %296 = vmatpush1.msra.mxu0 0.0
    %297 = vmatprep.subr.mxu0 0.0
    %298 = vmatpush1.msra.mxu0 0.0
    %299 = vmatprep.subr.mxu0 0.0
    %300 = vmatpush1.msra.mxu0 0.0
    %301 = vmatprep.subr.mxu0 0.0
    %302 = vmatpush1.msra.mxu0 0.0
    %303 = vmatprep.subr.mxu0 0.0
    %304 = vmatpush1.msra.mxu0 0.0
    %305 = vmatprep.subr.mxu0 0.0
    %306 = vmatpush1.msra.mxu0 0.0
    %307 = vmatprep.subr.mxu0 0.0
    %308 = vmatpush1.msra.mxu0 0.0
    %309 = vmatprep.subr.mxu0 0.0
    %310 = vmatpush1.msra.mxu0 0.0
    %311 = vmatprep.subr.mxu0 0.0
    %312 = vmatpush1.msra.mxu0 0.0
    %313 = vmatprep.subr.mxu0 0.0
    %314 = vmatpush1.msra.mxu0 0.0
    %315 = vmatprep.subr.mxu0 0.0
    %316 = vmatpush1.msra.mxu0 0.0
    %317 = vmatprep.subr.mxu0 0.0
    %318 = vmatpush1.msra.mxu0 0.0
    %319 = vmatprep.subr.mxu0 0.0
    %320 = vmatpush1.msra.mxu0 0.0
    %321 = vmatprep.mubr.f32.mxu0 0.0
    %322 = vmatmul.mubr.f32.gmra.mrb[0].mxu0 %v233
    %v323 = vpop.f32.mrb[0].mxu0
    %v324 = vadd.f32 %v255, %v323
    %v325 = vpop.f32.mrb[0].mxu0
    %326 = vdwg.mxu0
    %vm327 = vcmask 15360
    %328 = vst.msk [vmem:[%s7] sm:$0xff] %vm327, %v324
    // Predicated region
    $region34: #{tpu_custom_call.1} parent=1 // pred_check
      _
    $region35: #{tpu_custom_call.1} parent=1 // pred_check_branch
      %330 = sbr.rel (0) target = $region37
    $region36: #{tpu_custom_call.1} parent=1 // pred_region
      _
    $region37: #{tpu_custom_call.1} parent=1 // pred_fallthru
      _
    // Predicated region
    $region38: #{tpu_custom_call.1} parent=1 // pred_check
      _
    $region39: #{tpu_custom_call.1} parent=1 // pred_check_branch
      %332 = sbr.rel (0) target = $region41
    $region40: #{tpu_custom_call.1} parent=1 // pred_region
      _
    $region41: #{tpu_custom_call.1} parent=1 // pred_fallthru
      _
    %333 = vsyncpa [#allocation3], 1

</llo_original>
